<compile_context>
chip_gen: v6e
topology: v6e:2x2x1
jax: 0.10.0
libtpu: 0.0.40
codegen_flags: <defaults>
</compile_context>

<pallas_src>
import functools

import jax
import jax.numpy as jnp
from jax import lax
from jax.experimental import pallas as pl
from jax.experimental.pallas import tpu as pltpu


def _conv_relu_bn_kernel(x_ref, w_ref, bias_ref, scale_ref, shift_ref, o_ref,
                         xp_ref, *, kh, pad, h_in, strip_h, compute_dtype):
    """One (image, row-strip) grid step.

    x_ref    : (1, H, W*Cin)        channel-packed NHWC image (fetched once per image)
    w_ref    : (KH*W*Cin, Wo*Cout)  banded conv weights (all taps folded into K)
    bias_ref : (1, Wo*Cout)         conv bias tiled over W
    scale_ref/shift_ref : (1, Wo*Cout)  eval-mode BN affine tiled over W
    o_ref    : (1, strip_h, Wo*Cout)    lane-dense output strip
    xp_ref   : (H + 2*pad, W*Cin) f32 scratch: H-zero-padded copy of the image
    """
    s = pl.program_id(1)

    # In-kernel zero padding, built once per image (strip 0) and reused by all strips.
    @pl.when(s == 0)
    def _():
        xp_ref[...] = jnp.zeros_like(xp_ref)
        xp_ref[pad:pad + h_in, :] = x_ref[0].astype(xp_ref.dtype)

    row0 = s * strip_h
    # Fold the KH row taps into the contraction: LHS is (strip_h, KH*W*Cin).
    lhs = jnp.concatenate(
        [xp_ref[pl.ds(row0 + dy, strip_h), :] for dy in range(kh)],
        axis=1).astype(compute_dtype)

    # Single MXU contraction, f32 accumulation.  N = Wo*Cout is lane-dense.
    acc = jnp.dot(lhs, w_ref[...], preferred_element_type=jnp.float32)
    acc = acc + bias_ref[...]                        # conv bias
    acc = jnp.maximum(acc, 0.0)                      # ReLU
    acc = acc * scale_ref[...] + shift_ref[...]      # BatchNorm (eval-mode affine)
    o_ref[0] = acc.astype(o_ref.dtype)               # unmasked lane-dense store


def _choose_strip_rows(ho):
    if ho % 8 != 0:
        return ho
    for cand in (64, 32, 16, 8):
        if cand <= ho and ho % cand == 0:
            return cand
    return ho


def basic_conv2d_g_forward_packed(x_packed, conv_w, conv_b, bn_gamma, bn_beta,
                                  bn_mean, bn_var, *, padding=1, eps=1e-3,
                                  strip_rows=None, compute_dtype=jnp.bfloat16):
    """Core op.  x_packed: (N, H, W*Cin) channel-packed NHWC.  Returns (N, Ho, Wo*Cout)."""
    N, H, WC = x_packed.shape
    Cout, Cin, KH, KW = conv_w.shape
    assert WC % Cin == 0
    W = WC // Cin
    Ho = H + 2 * padding - KH + 1
    Wo = W + 2 * padding - KW + 1
    Hp = H + 2 * padding

    # ---- weight-side preprocessing (weight-sized, amortized; no activation passes) ----
    # Banded matrix B[dy*W*Cin + w'*Cin + cin, w*Cout + c] = conv_w[c, cin, dy, w'-w+pad]
    # when 0 <= w'-w+pad < KW else 0.  This folds the KW taps AND the W zero-padding
    # into the contraction, so the kernel needs a single matmul and no W padding.
    wt = jnp.transpose(conv_w, (2, 3, 1, 0))                     # (KH, KW, Cin, Cout)
    dx = jnp.arange(W)[:, None] - jnp.arange(Wo)[None, :] + padding   # (W, Wo)
    valid = (dx >= 0) & (dx < KW)
    band = wt[:, jnp.clip(dx, 0, KW - 1)]                        # (KH, W, Wo, Cin, Cout)
    band = jnp.where(valid[None, :, :, None, None], band, 0.0)
    band = jnp.transpose(band, (0, 1, 3, 2, 4))                  # (KH, W, Cin, Wo, Cout)
    w_mat = band.reshape(KH * W * Cin, Wo * Cout).astype(compute_dtype)

    # Per-channel epilogue vectors tiled to the (w*Cout + c) lane packing.
    bias = jnp.tile(conv_b.astype(jnp.float32), Wo).reshape(1, Wo * Cout)
    scale_c = bn_gamma / jnp.sqrt(bn_var + eps)
    shift_c = bn_beta - bn_mean * scale_c
    scale = jnp.tile(scale_c.astype(jnp.float32), Wo).reshape(1, Wo * Cout)
    shift = jnp.tile(shift_c.astype(jnp.float32), Wo).reshape(1, Wo * Cout)

    if (strip_rows is None or Ho % strip_rows != 0
            or (strip_rows % 8 != 0 and strip_rows != Ho)):
        strip_rows = _choose_strip_rows(Ho)
    n_strips = Ho // strip_rows

    kernel = functools.partial(_conv_relu_bn_kernel, kh=KH, pad=padding, h_in=H,
                               strip_h=strip_rows, compute_dtype=compute_dtype)

    itemsize = jnp.dtype(x_packed.dtype).itemsize
    flops = 2 * N * Ho * (KH * W * Cin) * (Wo * Cout)            # actual MXU work
    bytes_accessed = (N * H * W * Cin * itemsize
                      + KH * W * Cin * Wo * Cout * jnp.dtype(compute_dtype).itemsize
                      + 3 * Wo * Cout * 4
                      + N * Ho * Wo * Cout * itemsize)

    out = pl.pallas_call(
        kernel,
        out_shape=jax.ShapeDtypeStruct((N, Ho, Wo * Cout), x_packed.dtype),
        grid_spec=pltpu.PrefetchScalarGridSpec(
            num_scalar_prefetch=0,
            grid=(N, n_strips),
            in_specs=[
                # Whole image per batch index; index_map constant in the strip axis
                # so it is DMA'd once per image, not once per strip.
                pl.BlockSpec((1, H, W * Cin), lambda n, s: (n, 0, 0)),
                pl.BlockSpec((KH * W * Cin, Wo * Cout), lambda n, s: (0, 0)),
                pl.BlockSpec((1, Wo * Cout), lambda n, s: (0, 0)),
                pl.BlockSpec((1, Wo * Cout), lambda n, s: (0, 0)),
                pl.BlockSpec((1, Wo * Cout), lambda n, s: (0, 0)),
            ],
            out_specs=pl.BlockSpec((1, strip_rows, Wo * Cout),
                                   lambda n, s: (n, s, 0)),
            scratch_shapes=[pltpu.VMEM((Hp, W * Cin), jnp.float32)],
        ),
        compiler_params=pltpu.CompilerParams(
            dimension_semantics=("parallel", "arbitrary"),   # batch across TCs; strips reuse scratch
            vmem_limit_bytes=32 * 1024 * 1024,
        ),
        cost_estimate=pl.CostEstimate(flops=flops, transcendentals=0,
                                      bytes_accessed=bytes_accessed),
    )(x_packed, w_mat, bias, scale, shift)
    return out


@functools.partial(jax.jit,
                   static_argnames=("padding", "eps", "strip_rows", "compute_dtype"))
def basic_conv2d_g_forward(x_nhwc, conv_w, conv_b, bn_gamma, bn_beta, bn_mean, bn_var,
                           *, padding=1, eps=1e-3, strip_rows=None,
                           compute_dtype=jnp.bfloat16):
    """NHWC wrapper: (N,H,W,Cin) -> (N,Ho,Wo,Cout).  Chained layers should use the
    packed form (basic_conv2d_g_forward_packed) directly and skip these reshapes."""
    N, H, W, Cin = x_nhwc.shape
    Cout = conv_w.shape[0]
    out = basic_conv2d_g_forward_packed(
        x_nhwc.reshape(N, H, W * Cin), conv_w, conv_b, bn_gamma, bn_beta, bn_mean,
        bn_var, padding=padding, eps=eps, strip_rows=strip_rows,
        compute_dtype=compute_dtype)
    Ho = out.shape[1]
    return out.reshape(N, Ho, out.shape[2] // Cout, Cout)


if __name__ == "__main__":
    key = jax.random.PRNGKey(0)
    ks = jax.random.split(key, 7)

    # Small shapes consistent with the module: batch=2, in_channels=4,
    # out_channels=8, 16x16 spatial, 3x3 conv with padding=1.
    N, Cin, H, W = 2, 4, 16, 16
    Cout, K, pad = 8, 3, 1
    eps = 1e-3   # nn.BatchNorm2d(out_channels, eps=0.001) in the module

    data_nchw = jax.random.normal(ks[0], (N, Cin, H, W), dtype=jnp.float32)

    # PyTorch-style uniform(-1/sqrt(fan_in), 1/sqrt(fan_in)) conv init.
    fan_in = Cin * K * K
    bound = 1.0 / (fan_in ** 0.5)
    conv_w = jax.random.uniform(ks[1], (Cout, Cin, K, K), jnp.float32, -bound, bound)
    conv_b = jax.random.uniform(ks[2], (Cout,), jnp.float32, -bound, bound)

    # BatchNorm2d params / running stats (eval mode).
    bn_gamma = jax.random.uniform(ks[3], (Cout,), jnp.float32, 0.5, 1.5)
    bn_beta = 0.1 * jax.random.normal(ks[4], (Cout,), jnp.float32)
    bn_mean = 0.1 * jax.random.normal(ks[5], (Cout,), jnp.float32)
    bn_var = jax.random.uniform(ks[6], (Cout,), jnp.float32, 0.5, 1.5)

    # One-time NCHW -> NHWC conversion at the NETWORK boundary (not per layer).
    x_nhwc = jnp.transpose(data_nchw, (0, 2, 3, 1))

    out_nhwc = basic_conv2d_g_forward(x_nhwc, conv_w, conv_b, bn_gamma, bn_beta,
                                      bn_mean, bn_var, padding=pad, eps=eps,
                                      strip_rows=8)
    out_nhwc = jax.block_until_ready(out_nhwc)
    out_nchw = jnp.transpose(out_nhwc, (0, 3, 1, 2))

    # Pure-JAX f32 reference: conv -> +bias -> relu -> eval-mode BN (dropout = identity).
    ref = lax.conv_general_dilated(
        data_nchw, conv_w, window_strides=(1, 1),
        padding=((pad, pad), (pad, pad)),
        dimension_numbers=("NCHW", "OIHW", "NCHW"))
    ref = ref + conv_b.reshape(1, Cout, 1, 1)
    ref = jnp.maximum(ref, 0.0)
    ref = ((ref - bn_mean.reshape(1, Cout, 1, 1))
           / jnp.sqrt(bn_var.reshape(1, Cout, 1, 1) + eps)
           * bn_gamma.reshape(1, Cout, 1, 1)
           + bn_beta.reshape(1, Cout, 1, 1))

    assert out_nchw.shape == (N, Cout, H, W), out_nchw.shape
    max_err = float(jnp.max(jnp.abs(out_nchw - ref)))
    # bf16 MXU operands with f32 accumulation -> loosened tolerance vs f32 reference.
    assert jnp.allclose(out_nchw, ref, atol=2e-2, rtol=2e-2), \
        f"mismatch vs reference (max abs err {max_err})"

    print("KERNEL_OK")
</pallas_src>

<mosaic_0001>
module attributes {stable_mosaic.version = 11 : i64} {
  func.func @_conv_relu_bn_kernel(%arg0: i32, %arg1: i32, %arg2: memref<1x16x64xf32, #tpu.memory_space<vmem>>, %arg3: memref<192x128xbf16, #tpu.memory_space<vmem>>, %arg4: memref<1x128xf32, #tpu.memory_space<vmem>>, %arg5: memref<1x128xf32, #tpu.memory_space<vmem>>, %arg6: memref<1x128xf32, #tpu.memory_space<vmem>>, %arg7: memref<1x8x128xf32, #tpu.memory_space<vmem>>, %arg8: memref<18x64xf32, #tpu.memory_space<vmem>>) attributes {dimension_semantics = [#tpu.dimension_semantics<parallel>, #tpu.dimension_semantics<arbitrary>], iteration_bounds = array<i64: 2, 2>, scalar_prefetch = 0 : i64, scratch_operands = 1 : i64, tpu.core_type = #tpu.core_type<tc>, window_params = [{transform_indices = @transform_0, window_bounds = array<i64: 1, 16, 64>}, {pipeline_mode = #tpu.pipeline_mode<synchronous>, transform_indices = @transform_1, window_bounds = array<i64: 192, 128>}, {pipeline_mode = #tpu.pipeline_mode<synchronous>, transform_indices = @transform_2, window_bounds = array<i64: 1, 128>}, {pipeline_mode = #tpu.pipeline_mode<synchronous>, transform_indices = @transform_3, window_bounds = array<i64: 1, 128>}, {pipeline_mode = #tpu.pipeline_mode<synchronous>, transform_indices = @transform_4, window_bounds = array<i64: 1, 128>}, {transform_indices = @transform_5, window_bounds = array<i64: 1, 8, 128>}]} {
    %c0_i32 = arith.constant 0 : i32
    %0 = arith.cmpi eq, %arg1, %c0_i32 : i32
    %1 = arith.extui %0 : i1 to i32
    %c0_i32_0 = arith.constant 0 : i32
    %2 = arith.cmpi ne, %1, %c0_i32_0 : i32
    scf.if %2 {
      %cst_16 = arith.constant 0.000000e+00 : f32
      %31 = vector.broadcast %cst_16 : f32 to vector<18x64xf32>
      %c0_17 = arith.constant 0 : index
      %c0_18 = arith.constant 0 : index
      %32 = vector.load %arg8[%c0_17, %c0_18] : memref<18x64xf32, #tpu.memory_space<vmem>>, vector<18x64xf32>
      tpu.vector_store %arg8[%c0_17, %c0_18], %31 {strides = array<i32>} : memref<18x64xf32, #tpu.memory_space<vmem>>, vector<18x64xf32>,
      %c0_19 = arith.constant 0 : index
      %c0_20 = arith.constant 0 : index
      %c0_21 = arith.constant 0 : index
      %33 = vector.load %arg2[%c0_19, %c0_20, %c0_21] : memref<1x16x64xf32, #tpu.memory_space<vmem>>, vector<1x16x64xf32>
      %34 = vector.shape_cast %33 : vector<1x16x64xf32> to vector<16x64xf32>
      %c1 = arith.constant 1 : index
      %c0_22 = arith.constant 0 : index
      %35 = vector.load %arg8[%c1, %c0_22] : memref<18x64xf32, #tpu.memory_space<vmem>>, vector<16x64xf32>
      tpu.vector_store %arg8[%c1, %c0_22], %34 {strides = array<i32>} : memref<18x64xf32, #tpu.memory_space<vmem>>, vector<16x64xf32>,
    } else {
    }
    %c8_i32 = arith.constant 8 : i32
    %3 = arith.muli %arg1, %c8_i32 : i32
    %c0_i32_1 = arith.constant 0 : i32
    %4 = arith.addi %3, %c0_i32_1 : i32
    %5 = arith.index_cast %4 : i32 to index
    %c0 = arith.constant 0 : index
    %6 = vector.load %arg8[%5, %c0] : memref<18x64xf32, #tpu.memory_space<vmem>>, vector<8x64xf32>
    %c1_i32 = arith.constant 1 : i32
    %7 = arith.addi %3, %c1_i32 : i32
    %8 = arith.index_cast %7 : i32 to index
    %c0_2 = arith.constant 0 : index
    %9 = vector.load %arg8[%8, %c0_2] : memref<18x64xf32, #tpu.memory_space<vmem>>, vector<8x64xf32>
    %c2_i32 = arith.constant 2 : i32
    %10 = arith.addi %3, %c2_i32 : i32
    %11 = arith.index_cast %10 : i32 to index
    %c0_3 = arith.constant 0 : index
    %12 = vector.load %arg8[%11, %c0_3] : memref<18x64xf32, #tpu.memory_space<vmem>>, vector<8x64xf32>
    %13 = tpu.concatenate %6, %9, %12 in 1 : vector<8x64xf32>, vector<8x64xf32>, vector<8x64xf32> -> vector<8x192xf32>
    %14 = arith.truncf %13 : vector<8x192xf32> to vector<8x192xbf16>
    %c0_4 = arith.constant 0 : index
    %c0_5 = arith.constant 0 : index
    %15 = vector.load %arg3[%c0_4, %c0_5] : memref<192x128xbf16, #tpu.memory_space<vmem>>, vector<192x128xbf16>
    %cst = arith.constant dense<0.000000e+00> : vector<8x128xf32>
    %16 = tpu.matmul %14, %15, %cst {dimension_numbers = #tpu.dot_dimension_numbers<[1], [0], [0], [1], [0, 0, 1, 1], [], []>} : vector<8x192xbf16>, vector<192x128xbf16>, vector<8x128xf32> -> vector<8x128xf32>
    %c0_6 = arith.constant 0 : index
    %c0_7 = arith.constant 0 : index
    %17 = vector.load %arg4[%c0_6, %c0_7] : memref<1x128xf32, #tpu.memory_space<vmem>>, vector<1x128xf32>
    %18 = vector.broadcast %17 : vector<1x128xf32> to vector<8x128xf32>
    %19 = arith.addf %16, %18 : vector<8x128xf32>
    %cst_8 = arith.constant 0.000000e+00 : f32
    %20 = vector.broadcast %cst_8 : f32 to vector<8x128xf32>
    %21 = arith.maximumf %19, %20 : vector<8x128xf32>
    %c0_9 = arith.constant 0 : index
    %c0_10 = arith.constant 0 : index
    %22 = vector.load %arg5[%c0_9, %c0_10] : memref<1x128xf32, #tpu.memory_space<vmem>>, vector<1x128xf32>
    %23 = vector.broadcast %22 : vector<1x128xf32> to vector<8x128xf32>
    %24 = arith.mulf %21, %23 : vector<8x128xf32>
    %c0_11 = arith.constant 0 : index
    %c0_12 = arith.constant 0 : index
    %25 = vector.load %arg6[%c0_11, %c0_12] : memref<1x128xf32, #tpu.memory_space<vmem>>, vector<1x128xf32>
    %26 = vector.broadcast %25 : vector<1x128xf32> to vector<8x128xf32>
    %27 = arith.addf %24, %26 : vector<8x128xf32>
    %c0_13 = arith.constant 0 : index
    %c0_14 = arith.constant 0 : index
    %c0_15 = arith.constant 0 : index
    %28 = vector.load %arg7[%c0_13, %c0_14, %c0_15] : memref<1x8x128xf32, #tpu.memory_space<vmem>>, vector<1x8x128xf32>
    %29 = vector.shape_cast %28 : vector<1x8x128xf32> to vector<8x128xf32>
    %30 = vector.shape_cast %27 : vector<8x128xf32> to vector<1x8x128xf32>
    tpu.vector_store %arg7[%c0_13, %c0_14, %c0_15], %30 {strides = array<i32>} : memref<1x8x128xf32, #tpu.memory_space<vmem>>, vector<1x8x128xf32>,
    return
  }
  func.func @transform_0(%arg0: i32, %arg1: i32) -> (i32, i32, i32) {
    %c0_i32 = arith.constant 0 : i32
    %c0_i32_0 = arith.constant 0 : i32
    %c0_i32_1 = arith.constant 0 : i32
    return %arg0, %c0_i32, %c0_i32_0 : i32, i32, i32
  }
  func.func @transform_1(%arg0: i32, %arg1: i32) -> (i32, i32) {
    %c0_i32 = arith.constant 0 : i32
    %c0_i32_0 = arith.constant 0 : i32
    %c0_i32_1 = arith.constant 0 : i32
    return %c0_i32, %c0_i32_0 : i32, i32
  }
  func.func @transform_2(%arg0: i32, %arg1: i32) -> (i32, i32) {
    %c0_i32 = arith.constant 0 : i32
    %c0_i32_0 = arith.constant 0 : i32
    %c0_i32_1 = arith.constant 0 : i32
    return %c0_i32, %c0_i32_0 : i32, i32
  }
  func.func @transform_3(%arg0: i32, %arg1: i32) -> (i32, i32) {
    %c0_i32 = arith.constant 0 : i32
    %c0_i32_0 = arith.constant 0 : i32
    %c0_i32_1 = arith.constant 0 : i32
    return %c0_i32, %c0_i32_0 : i32, i32
  }
  func.func @transform_4(%arg0: i32, %arg1: i32) -> (i32, i32) {
    %c0_i32 = arith.constant 0 : i32
    %c0_i32_0 = arith.constant 0 : i32
    %c0_i32_1 = arith.constant 0 : i32
    return %c0_i32, %c0_i32_0 : i32, i32
  }
  func.func @transform_5(%arg0: i32, %arg1: i32) -> (i32, i32, i32) {
    %c0_i32 = arith.constant 0 : i32
    %c0_i32_0 = arith.constant 0 : i32
    return %arg0, %arg1, %c0_i32 : i32, i32, i32
  }
}

</mosaic_0001>

<llo_original>
// kernel: tile.23
$region0: #{tile.23}
  #allocation0 [shape = 's32[1]{0}', space=sflag, size = 0x4, scoped, tag = 'scoped memory for tile.23']
  %s0 = inlined_call_operand.vmem [shape: f32[8], index: 0, kind: input, shape index: {}]
  %s1 = inlined_call_operand.vmem [shape: f32[16,8], index: 1, kind: output, shape index: {}]
  // Predicated region
  $region2: #{tile.23} parent=0 // pred_check
    _
  $region3: #{tile.23} parent=0 // pred_check_branch
    %3 = sbr.rel (0) target = $region5
  $region4: #{tile.23} parent=0 // pred_region
    _
  $region5: #{tile.23} parent=0 // pred_fallthru
    _
  %v4 = vld [vmem:[%s0] ss:$0 sm:$0xff]
  %5 = vst [vmem:[%s1] sm:$0xff] %v4
  %s6 = scalar_lea.vmem %s1, 8
  %7 = vst [vmem:[%s6] sm:$0xff] %v4

// kernel: tile.24
$region0: #{tile.24}
  %s0 = inlined_call_operand.vmem [shape: f32[16,8], index: 0, kind: input, shape index: {}]
  %s1 = inlined_call_operand.vmem [shape: f32[1,128], index: 1, kind: output, shape index: {}]
  $region1: #{tile.24} parent=0
    #allocation0 [shape = 'u8[4096]{0}', space=vmem, size = 0x1000, scoped, tag = 'scoped mem for output reshape']
    %v2 = vld [vmem:[%s0] sm:$0x1]
    %vm3 = vcmask 64512
    %4 = vst.msk [vmem:[#allocation0] sm:$0x1] %vm3, %v2
    %s5 = scalar_lea.vmem %s0, 15
    %v6 = vld [vmem:[%s5] sm:$0x1]
    %7 = vrot.lane.b32.xlu0 %v6, 120
    %v8 = vpop.permute.xlu0 %7
    %vm9 = vcmask 1048512
    %10 = vst.msk [vmem:[#allocation0] sm:$0x1] %vm9, %v8
    %s11 = scalar_lea.vmem %s0, 14
    %v12 = vld [vmem:[%s11] sm:$0x1]
    %13 = vrot.lane.b32.xlu0 %v12, 112
    %v14 = vpop.permute.xlu0 %13
    %vm15 = vcmask 982912
    %16 = vst.msk [vmem:[#allocation0] sm:$0x1] %vm15, %v14
    %s17 = scalar_lea.vmem %s0, 13
    %v18 = vld [vmem:[%s17] sm:$0x1]
    %19 = vrot.lane.b32.xlu0 %v18, 104
    %v20 = vpop.permute.xlu0 %19
    %vm21 = vcmask 917312
    %22 = vst.msk [vmem:[#allocation0] sm:$0x1] %vm21, %v20
    %s23 = scalar_lea.vmem %s0, 12
    %v24 = vld [vmem:[%s23] sm:$0x1]
    %25 = vrot.lane.b32.xlu0 %v24, 96
    %v26 = vpop.permute.xlu0 %25
    %vm27 = vcmask 851712
    %28 = vst.msk [vmem:[#allocation0] sm:$0x1] %vm27, %v26
    %s29 = scalar_lea.vmem %s0, 11
    %v30 = vld [vmem:[%s29] sm:$0x1]
    %31 = vrot.lane.b32.xlu0 %v30, 88
    %v32 = vpop.permute.xlu0 %31
    %vm33 = vcmask 786112
    %34 = vst.msk [vmem:[#allocation0] sm:$0x1] %vm33, %v32
    %s35 = scalar_lea.vmem %s0, 10
    %v36 = vld [vmem:[%s35] sm:$0x1]
    %37 = vrot.lane.b32.xlu0 %v36, 80
    %v38 = vpop.permute.xlu0 %37
    %vm39 = vcmask 720512
    %40 = vst.msk [vmem:[#allocation0] sm:$0x1] %vm39, %v38
    %s41 = scalar_lea.vmem %s0, 9
    %v42 = vld [vmem:[%s41] sm:$0x1]
    %43 = vrot.lane.b32.xlu0 %v42, 72
    %v44 = vpop.permute.xlu0 %43
    %vm45 = vcmask 654912
    %46 = vst.msk [vmem:[#allocation0] sm:$0x1] %vm45, %v44
    %s47 = scalar_lea.vmem %s0, 8
    %v48 = vld [vmem:[%s47] sm:$0x1]
    %49 = vrot.lane.b32.xlu0 %v48, 64
    %v50 = vpop.permute.xlu0 %49
    %vm51 = vcmask 589312
    %52 = vst.msk [vmem:[#allocation0] sm:$0x1] %vm51, %v50
    %s53 = scalar_lea.vmem %s0, 7
    %v54 = vld [vmem:[%s53] sm:$0x1]
    %55 = vrot.lane.b32.xlu0 %v54, 56
    %v56 = vpop.permute.xlu0 %55
    %vm57 = vcmask 523712
    %58 = vst.msk [vmem:[#allocation0] sm:$0x1] %vm57, %v56
    %s59 = scalar_lea.vmem %s0, 6
    %v60 = vld [vmem:[%s59] sm:$0x1]
    %61 = vrot.lane.b32.xlu0 %v60, 48
    %v62 = vpop.permute.xlu0 %61
    %vm63 = vcmask 458112
    %64 = vst.msk [vmem:[#allocation0] sm:$0x1] %vm63, %v62
    %s65 = scalar_lea.vmem %s0, 5
    %v66 = vld [vmem:[%s65] sm:$0x1]
    %67 = vrot.lane.b32.xlu0 %v66, 40
    %v68 = vpop.permute.xlu0 %67
    %vm69 = vcmask 392512
    %70 = vst.msk [vmem:[#allocation0] sm:$0x1] %vm69, %v68
    %s71 = scalar_lea.vmem %s0, 4
    %v72 = vld [vmem:[%s71] sm:$0x1]
    %73 = vrot.lane.b32.xlu0 %v72, 32
    %v74 = vpop.permute.xlu0 %73
    %vm75 = vcmask 326912
    %76 = vst.msk [vmem:[#allocation0] sm:$0x1] %vm75, %v74
    %s77 = scalar_lea.vmem %s0, 3
    %v78 = vld [vmem:[%s77] sm:$0x1]
    %79 = vrot.lane.b32.xlu0 %v78, 24
    %v80 = vpop.permute.xlu0 %79
    %vm81 = vcmask 261312
    %82 = vst.msk [vmem:[#allocation0] sm:$0x1] %vm81, %v80
    %s83 = scalar_lea.vmem %s0, 2
    %v84 = vld [vmem:[%s83] sm:$0x1]
    %85 = vrot.lane.b32.xlu0 %v84, 16
    %v86 = vpop.permute.xlu0 %85
    %vm87 = vcmask 195712
    %88 = vst.msk [vmem:[#allocation0] sm:$0x1] %vm87, %v86
    %s89 = scalar_lea.vmem %s0, 1
    %v90 = vld [vmem:[%s89] sm:$0x1]
    %91 = vrot.lane.b32.xlu0 %v90, 8
    %v92 = vpop.permute.xlu0 %91
    %vm93 = vcmask 130112
    %94 = vst.msk [vmem:[#allocation0] sm:$0x1] %vm93, %v92
    %s96 = sshll.u32 1, 1
    %s97 = ssub.s32 %s96, 1
    %v99 = vld [vmem:[#allocation0] sm:%s97]
    %s100 = sshll.u32 1, 1
    %s101 = ssub.s32 %s100, 1
    %102 = vst [vmem:[%s1] sm:%s101] %v99

// kernel: basic_conv2d_g_forward.1
$region0: #{basic_conv2d_g_forward.1}
  #allocation0 [shape = 'u32[]', space=smem, size = 0x4, offset = 0x4, fixed_abs, tag = 'smem constant byte address 0x4 - core index']
  #allocation1 [shape = 'u32[144,128]{1,0:T(1,128)}', space=vmem, size = 0x12000, scoped, tag = 'internal scratch']
  #allocation2 [shape = 'f32[18,64]{1,0:T(8,128)}', space=vmem, size = 0x3000, scoped, tag = 'scratch operand']
  %s0 = inlined_call_operand.vmem [shape: f32[2,16,64], index: 0, kind: input, shape index: {}]
  %s1 = inlined_call_operand.vmem [shape: bf16[192,128], index: 1, kind: input, shape index: {}]
  %s2 = inlined_call_operand.vmem [shape: f32[1,128], index: 2, kind: input, shape index: {}]
  %s3 = inlined_call_operand.vmem [shape: f32[1,128], index: 3, kind: input, shape index: {}]
  %s4 = inlined_call_operand.vmem [shape: f32[1,128], index: 4, kind: input, shape index: {}]
  %s5 = inlined_call_operand.vmem [shape: f32[2,16,128], index: 5, kind: output, shape index: {}]
  %s6 = sld [smem:[#allocation0]]
  $region57: #{basic_conv2d_g_forward.1} parent=0
    _
  %s8 = ssub.s32 1, %s6
  %s9 = scalar_select 0, %s8, %s6
  loop: start=0, step=1, limit=6
  $region2: #{basic_conv2d_g_forward.1} parent=0 // loop_pre_header
    _
  $region3: #{basic_conv2d_g_forward.1} parent=0 // loop_header
    %s11 = sphi 0, %s15
    %p12 = scmp.ge.s32.totalorder %s11, 6
    %s18 = sphi 0, %s30
    %s19 = sphi 0, %s26
    %s20 = sphi 0, %s18
    %s21 = sphi 0, %s19
    %s22 = sphi 0, %s20
    %s23 = sphi 0, %s21
    %s33 = sphi 0, %s35
    %s36 = sphi 0, %s33
    %s37 = sphi 0, %s36
    %s53 = sphi 0, %s37
    %s57 = sphi 0, %s57
    %s59 = sphi 0, %s57
    %s60 = sphi 0, %s59
    %s74 = sphi 0, %s60
    %s78 = sphi 0, %s78
    %s80 = sphi 0, %s78
    %s81 = sphi 0, %s80
    %s95 = sphi 0, %s81
    %s99 = sphi 0, %s99
    %s101 = sphi 0, %s99
    %s102 = sphi 0, %s101
    %s116 = sphi 0, %s102
    %s120 = sphi 0, %s120
    %s122 = sphi 0, %s120
    %s123 = sphi 0, %s122
    %s137 = sphi 0, %s123
    %s145 = sphi 0, %s147
    %s148 = sphi 0, %s145
    %s149 = sphi 0, %s148
    %s165 = sphi 0, %s149
  $region4: #{basic_conv2d_g_forward.1} parent=0 // loop_header_branch
    %14 = sbr.rel (%p12) target = $region8
  $region5: #{basic_conv2d_g_forward.1} parent=0 // loop_body
    %s16 = ssub.s32 %s11, 1
    %s17 = ssub.s32 %s11, 2
    %s24 = sadd.s32 1, %s19
    %p25 = scmp.ge.s32.totalorder %s24, 2
    %s26 = scalar_select %p25, 0, %s24
    %s27 = sadd.s32 1, %s18
    %s28 = scalar_select %p25, %s27, %s18
    %p29 = scmp.ge.s32.totalorder %s28, 2
    %s30 = scalar_select %p29, 0, %s28
    %s31 = ssub.s32 %s18, %s30
    %p32 = scmp.eq.s32.totalorder %s31, 0
    %s34 = sadd.s32 %s33, 1
    %s35 = scalar_select %p32, %s33, %s34
    %p38 = pneg %p32
    %p39 = scmp.eq.s32.totalorder %s11, 3
    %p40 = por %p38, %p39
    %p41 = scmp.ne.s32.totalorder %s33, %s36
    %p42 = scmp.eq.s32.totalorder %s11, 0
    %p43 = por %p41, %p42
    %p44 = scmp.ne.s32.totalorder %s33, %s36
    %p45 = scmp.eq.s32.totalorder %s16, 3
    %p46 = por %p44, %p45
    %p47 = scmp.ne.s32.totalorder %s36, %s37
    %p48 = scmp.eq.s32.totalorder %s16, 0
    %p49 = por %p47, %p48
    %p50 = scmp.ne.s32.totalorder %s36, %s37
    %p51 = scmp.eq.s32.totalorder %s17, 3
    %p52 = por %p50, %p51
    %p54 = scmp.ne.s32.totalorder %s37, %s53
    %p55 = scmp.eq.s32.totalorder %s17, 0
    %p56 = por %p54, %p55
    %s58 = sadd.s32 %s57, 1
    %p61 = scmp.eq.s32.totalorder %s11, 3
    %p62 = scmp.ne.s32.totalorder %s57, %s59
    %p63 = scmp.eq.s32.totalorder %s11, 0
    %p64 = por %p62, %p63
    %p65 = scmp.ne.s32.totalorder %s57, %s59
    %p66 = scmp.eq.s32.totalorder %s16, 3
    %p67 = por %p65, %p66
    %p68 = scmp.ne.s32.totalorder %s59, %s60
    %p69 = scmp.eq.s32.totalorder %s16, 0
    %p70 = por %p68, %p69
    %p71 = scmp.ne.s32.totalorder %s59, %s60
    %p72 = scmp.eq.s32.totalorder %s17, 3
    %p73 = por %p71, %p72
    %p75 = scmp.ne.s32.totalorder %s60, %s74
    %p76 = scmp.eq.s32.totalorder %s17, 0
    %p77 = por %p75, %p76
    %s79 = sadd.s32 %s78, 1
    %p82 = scmp.eq.s32.totalorder %s11, 3
    %p83 = scmp.ne.s32.totalorder %s78, %s80
    %p84 = scmp.eq.s32.totalorder %s11, 0
    %p85 = por %p83, %p84
    %p86 = scmp.ne.s32.totalorder %s78, %s80
    %p87 = scmp.eq.s32.totalorder %s16, 3
    %p88 = por %p86, %p87
    %p89 = scmp.ne.s32.totalorder %s80, %s81
    %p90 = scmp.eq.s32.totalorder %s16, 0
    %p91 = por %p89, %p90
    %p92 = scmp.ne.s32.totalorder %s80, %s81
    %p93 = scmp.eq.s32.totalorder %s17, 3
    %p94 = por %p92, %p93
    %p96 = scmp.ne.s32.totalorder %s81, %s95
    %p97 = scmp.eq.s32.totalorder %s17, 0
    %p98 = por %p96, %p97
    %s100 = sadd.s32 %s99, 1
    %p103 = scmp.eq.s32.totalorder %s11, 3
    %p104 = scmp.ne.s32.totalorder %s99, %s101
    %p105 = scmp.eq.s32.totalorder %s11, 0
    %p106 = por %p104, %p105
    %p107 = scmp.ne.s32.totalorder %s99, %s101
    %p108 = scmp.eq.s32.totalorder %s16, 3
    %p109 = por %p107, %p108
    %p110 = scmp.ne.s32.totalorder %s101, %s102
    %p111 = scmp.eq.s32.totalorder %s16, 0
    %p112 = por %p110, %p111
    %p113 = scmp.ne.s32.totalorder %s101, %s102
    %p114 = scmp.eq.s32.totalorder %s17, 3
    %p115 = por %p113, %p114
    %p117 = scmp.ne.s32.totalorder %s102, %s116
    %p118 = scmp.eq.s32.totalorder %s17, 0
    %p119 = por %p117, %p118
    %s121 = sadd.s32 %s120, 1
    %p124 = scmp.eq.s32.totalorder %s11, 3
    %p125 = scmp.ne.s32.totalorder %s120, %s122
    %p126 = scmp.eq.s32.totalorder %s11, 0
    %p127 = por %p125, %p126
    %p128 = scmp.ne.s32.totalorder %s120, %s122
    %p129 = scmp.eq.s32.totalorder %s16, 3
    %p130 = por %p128, %p129
    %p131 = scmp.ne.s32.totalorder %s122, %s123
    %p132 = scmp.eq.s32.totalorder %s16, 0
    %p133 = por %p131, %p132
    %p134 = scmp.ne.s32.totalorder %s122, %s123
    %p135 = scmp.eq.s32.totalorder %s17, 3
    %p136 = por %p134, %p135
    %p138 = scmp.ne.s32.totalorder %s123, %s137
    %p139 = scmp.eq.s32.totalorder %s17, 0
    %p140 = por %p138, %p139
    %s141 = ssub.s32 %s18, %s30
    %s142 = ssub.s32 %s19, %s26
    %s143 = sor.u32 %s141, %s142
    %p144 = scmp.eq.s32.totalorder %s143, 0
    %s146 = sadd.s32 %s145, 1
    %s147 = scalar_select %p144, %s145, %s146
    %p150 = pneg %p144
    %p151 = scmp.eq.s32.totalorder %s11, 3
    %p152 = por %p150, %p151
    %p153 = scmp.ne.s32.totalorder %s145, %s148
    %p154 = scmp.eq.s32.totalorder %s11, 0
    %p155 = por %p153, %p154
    %p156 = scmp.ne.s32.totalorder %s145, %s148
    %p157 = scmp.eq.s32.totalorder %s16, 3
    %p158 = por %p156, %p157
    %p159 = scmp.ne.s32.totalorder %s148, %s149
    %p160 = scmp.eq.s32.totalorder %s16, 0
    %p161 = por %p159, %p160
    %p162 = scmp.ne.s32.totalorder %s148, %s149
    %p163 = scmp.eq.s32.totalorder %s17, 3
    %p164 = por %p162, %p163
    %p166 = scmp.ne.s32.totalorder %s149, %s165
    %p167 = scmp.eq.s32.totalorder %s17, 0
    %p168 = por %p166, %p167
    %p169 = scmp.le.s32.totalorder 1, %s11
    %p170 = scmp.lt.s32.totalorder %s11, 5
    %p171 = pnand %p169, %p170
    %p172 = pneg %p171
    // Predicated region
    $region9: #{basic_conv2d_g_forward.1} parent=5 // pred_check
      _
    $region10: #{basic_conv2d_g_forward.1} parent=5 // pred_check_branch
      %174 = sbr.rel (%p171) target = $region12
    $region11: #{basic_conv2d_g_forward.1} parent=5 // pred_region
      %s175 = ssub.s32 %s11, 1
      // Predicated region
      $region13: #{basic_conv2d_g_forward.1} parent=11 // pred_check
        %p176 = pneg %p70
      $region14: #{basic_conv2d_g_forward.1} parent=11 // pred_check_branch
        %178 = sbr.rel (%p176) target = $region16
      $region15: #{basic_conv2d_g_forward.1} parent=11 // pred_region
        _
      $region16: #{basic_conv2d_g_forward.1} parent=11 // pred_fallthru
        _
      // Predicated region
      $region17: #{basic_conv2d_g_forward.1} parent=11 // pred_check
        %p179 = pneg %p91
      $region18: #{basic_conv2d_g_forward.1} parent=11 // pred_check_branch
        %181 = sbr.rel (%p179) target = $region20
      $region19: #{basic_conv2d_g_forward.1} parent=11 // pred_region
        _
      $region20: #{basic_conv2d_g_forward.1} parent=11 // pred_fallthru
        _
      // Predicated region
      $region21: #{basic_conv2d_g_forward.1} parent=11 // pred_check
        %p182 = pneg %p112
      $region22: #{basic_conv2d_g_forward.1} parent=11 // pred_check_branch
        %184 = sbr.rel (%p182) target = $region24
      $region23: #{basic_conv2d_g_forward.1} parent=11 // pred_region
        _
      $region24: #{basic_conv2d_g_forward.1} parent=11 // pred_fallthru
        _
      // Predicated region
      $region25: #{basic_conv2d_g_forward.1} parent=11 // pred_check
        %p185 = pneg %p133
      $region26: #{basic_conv2d_g_forward.1} parent=11 // pred_check_branch
        %187 = sbr.rel (%p185) target = $region28
      $region27: #{basic_conv2d_g_forward.1} parent=11 // pred_region
        _
      $region28: #{basic_conv2d_g_forward.1} parent=11 // pred_fallthru
        _
    $region12: #{basic_conv2d_g_forward.1} parent=5 // pred_fallthru
      _
    %p188 = scmp.lt.s32.totalorder %s11, 4
    // Predicated region
    $region29: #{basic_conv2d_g_forward.1} parent=5 // pred_check
      %p189 = pneg %p188
    $region30: #{basic_conv2d_g_forward.1} parent=5 // pred_check_branch
      %191 = sbr.rel (%p189) target = $region32
    $region31: #{basic_conv2d_g_forward.1} parent=5 // pred_region
      // Predicated region
      $region33: #{basic_conv2d_g_forward.1} parent=31 // pred_check
        %p192 = pneg %p43
      $region34: #{basic_conv2d_g_forward.1} parent=31 // pred_check_branch
        %194 = sbr.rel (%p192) target = $region36
      $region35: #{basic_conv2d_g_forward.1} parent=31 // pred_region
        %p195 = scmp.lt.s32.totalorder %s18, 1
        %s196 = scalar_select %p195, %s18, 1
        %s197 = smul.addr %s196, 2
        %s198 = smul.addr %s197, 8
        %s199 = scalar_lea.vmem %s0, %s198
      $region36: #{basic_conv2d_g_forward.1} parent=31 // pred_fallthru
        _
    $region32: #{basic_conv2d_g_forward.1} parent=5 // pred_fallthru
      _
    %p200 = scmp.le.s32.totalorder 1, %s11
    %p201 = scmp.lt.s32.totalorder %s11, 5
    %p202 = pnand %p200, %p201
    %p203 = pneg %p202
    // Predicated region
    $region37: #{basic_conv2d_g_forward.1} parent=5 // pred_check
      _
    $region38: #{basic_conv2d_g_forward.1} parent=5 // pred_check_branch
      %205 = sbr.rel (%p202) target = $region40
    $region39: #{basic_conv2d_g_forward.1} parent=5 // pred_region
      %s206 = ssub.s32 %s11, 1
      %p207 = scmp.lt.s32.totalorder %s20, 1
      %s208 = scalar_select %p207, %s20, 1
      %s209 = smul.addr %s208, 2
      %s210 = smul.addr %s209, 8
      %s211 = scalar_lea.vmem %s0, %s210
      %p212 = pneg %p49
      %p213 = pneg %p46
      %p214 = pneg %p70
      %p215 = pneg %p67
      %p216 = pneg %p91
      %p217 = pneg %p88
      %p218 = pneg %p112
      %p219 = pneg %p109
      %p220 = pneg %p133
      %p221 = pneg %p130
      %p222 = pneg %p161
      %p223 = pneg %p158
      %p224 = scmp.lt.s32.totalorder %s20, 1
      %s225 = scalar_select %p224, %s20, 1
      %p226 = scmp.lt.s32.totalorder %s21, 1
      %s227 = scalar_select %p226, %s21, 1
      %s228 = smul.addr %s225, 2
      %s229 = sadd.s32 %s227, %s228
      %s230 = smul.addr %s229, 8
      %s231 = scalar_lea.vmem %s5, %s230
      %p232 = scmp.lt.s32.totalorder %s20, 1
      %s233 = scalar_select %p232, %s20, 1
      %s234 = smul.addr %s233, 2
      %s235 = smul.addr %s234, 8
      %s236 = scalar_lea.vmem %s0, %s235
      %p237 = scmp.lt.s32.totalorder %s20, 1
      %s238 = scalar_select %p237, %s20, 1
      %p239 = scmp.lt.s32.totalorder %s21, 1
      %s240 = scalar_select %p239, %s21, 1
      %s241 = smul.addr %s238, 2
      %s242 = sadd.s32 %s240, %s241
      %s243 = smul.addr %s242, 8
      %s244 = scalar_lea.vmem %s5, %s243
      %p246 = scmp.eq.s32.totalorder %s21, 0
      // Predicated region
      $region41: #{basic_conv2d_g_forward.1} parent=39 // pred_check
        %p247 = pneg %p246
      $region42: #{basic_conv2d_g_forward.1} parent=39 // pred_check_branch
        %249 = sbr.rel (%p247) target = $region44
      $region43: #{basic_conv2d_g_forward.1} parent=39 // pred_region
        %vm250 = vcmask 523264
        %251 = vst.msk [vmem:[#allocation2] sm:$0xff] %vm250, 0.0
        %252 = vst.msk [vmem:[#allocation2 + $0x8] sm:$0xff] %vm250, 0.0
        %vm253 = vcmask 517120
        %254 = vst.msk [vmem:[#allocation2 + $0x10] sm:$0x3] %vm253, 0.0
        %v255 = vld [vmem:[%s236] sm:$0xff]
        %v256 = vld [vmem:[%s236 + $0x8] sm:$0xff]
        %257 = vst.msk [vmem:[#allocation2 + $0x1] sm:$0xff] %vm250, %v255
        %258 = vst.msk [vmem:[#allocation2 + $0x9] sm:$0xff] %vm250, %v256
      $region44: #{basic_conv2d_g_forward.1} parent=39 // pred_fallthru
        _
      %s259 = smul.u32 %s21, 8
      %s260 = scalar_lea.vmem [#allocation2], %s259
      %v261 = vld [vmem:[%s260] sm:$0xff]
      %s262 = sadd.s32 %s259, 1
      %s263 = scalar_lea.vmem [#allocation2], %s262
      %v264 = vld [vmem:[%s263] sm:$0xff]
      %s265 = sadd.s32 %s259, 2
      %s266 = scalar_lea.vmem [#allocation2], %s265
      %v267 = vld [vmem:[%s266] sm:$0xff]
      %269 = vrot.lane.b32.xlu0 %v264, 64
      %v270 = vpop.permute.xlu0 %269
      %vm272 = vcmask 523264
      %v273 = vsel %vm272, %v261, %v270
      %v274 = vpack.c.bf16 %v273, %v273
      %v275 = vpack.c.bf16 %v267, %v267
      %v276 = vld [vmem:[%s1] sm:$0xf]
      %v277 = vld [vmem:[%s1 + $0x4] sm:$0xf]
      %v278 = vld [vmem:[%s1 + $0x8] sm:$0xf]
      %v279 = vld [vmem:[%s1 + $0xc] sm:$0xf]
      %v280 = vld [vmem:[%s1 + $0x10] sm:$0xf]
      %v281 = vld [vmem:[%s1 + $0x14] sm:$0xf]
      %v282 = vld [vmem:[%s1 + $0x18] sm:$0xf]
      %v283 = vld [vmem:[%s1 + $0x1c] sm:$0xf]
      %v284 = vld [vmem:[%s1 + $0x20] sm:$0xf]
      %v285 = vld [vmem:[%s1 + $0x24] sm:$0xf]
      %v286 = vld [vmem:[%s1 + $0x28] sm:$0xf]
      %v287 = vld [vmem:[%s1 + $0x2c] sm:$0xf]
      %v288 = vld [vmem:[%s1 + $0x30] sm:$0xf]
      %v289 = vld [vmem:[%s1 + $0x34] sm:$0xf]
      %v290 = vld [vmem:[%s1 + $0x38] sm:$0xf]
      %v291 = vld [vmem:[%s1 + $0x3c] sm:$0xf]
      %v292 = vld [vmem:[%s1 + $0x40] sm:$0xf]
      %v293 = vld [vmem:[%s1 + $0x44] sm:$0xf]
      %v294 = vld [vmem:[%s1 + $0x48] sm:$0xf]
      %v295 = vld [vmem:[%s1 + $0x4c] sm:$0xf]
      %v296 = vld [vmem:[%s1 + $0x50] sm:$0xf]
      %v297 = vld [vmem:[%s1 + $0x54] sm:$0xf]
      %v298 = vld [vmem:[%s1 + $0x58] sm:$0xf]
      %v299 = vld [vmem:[%s1 + $0x5c] sm:$0xf]
      %v300 = vld [vmem:[%s2] sm:$0x1]
      %v302 = vlaneseq
      %v303 = vshrl.u32 %v302, 7
      %v304 = vsub.s32 0, %v303
      %v305 = vrot.slane %v300, %v304
      %v331 = vunpack.c.l.b16 %v276
      %v332 = vunpack.c.l.b16 %v277
      %v333 = vunpack.c.l.b16 %v278
      %v334 = vunpack.c.l.b16 %v279
      %v335 = vunpack.c.l.b16 %v280
      %v336 = vunpack.c.l.b16 %v281
      %v337 = vunpack.c.l.b16 %v282
      %v338 = vunpack.c.l.b16 %v283
      %v339 = vunpack.c.l.b16 %v284
      %v340 = vunpack.c.l.b16 %v285
      %v341 = vunpack.c.l.b16 %v286
      %v342 = vunpack.c.l.b16 %v287
      %v343 = vunpack.c.l.b16 %v288
      %v344 = vunpack.c.l.b16 %v289
      %v345 = vunpack.c.l.b16 %v290
      %v346 = vunpack.c.l.b16 %v291
      %v347 = vunpack.c.l.b16 %v292
      %v348 = vunpack.c.l.b16 %v293
      %v349 = vunpack.c.l.b16 %v294
      %v350 = vunpack.c.l.b16 %v295
      %v351 = vunpack.c.l.b16 %v296
      %v352 = vunpack.c.l.b16 %v297
      %v353 = vunpack.c.l.b16 %v298
      %v354 = vunpack.c.l.b16 %v299
      %v355 = vpack.c.b16 %v332, %v331
      %v356 = vpack.c.b16 %v334, %v333
      %v357 = vpack.c.b16 %v336, %v335
      %v358 = vpack.c.b16 %v338, %v337
      %v359 = vpack.c.b16 %v340, %v339
      %v360 = vpack.c.b16 %v342, %v341
      %v361 = vpack.c.b16 %v344, %v343
      %v362 = vpack.c.b16 %v346, %v345
      %v363 = vpack.c.b16 %v348, %v347
      %v364 = vpack.c.b16 %v350, %v349
      %v365 = vpack.c.b16 %v352, %v351
      %v366 = vpack.c.b16 %v354, %v353
      %v380 = vsel %vm272, %v275, 0
      %382 = vmatprep.subr.bf16.mxu0 0
      %383 = vmatpush1.bf16.msra.mxu0 %v362
      %384 = vmatprep.subr.bf16.mxu0 0
      %385 = vmatpush1.bf16.msra.mxu0 %v361
      %386 = vmatprep.subr.bf16.mxu0 0
      %387 = vmatpush1.bf16.msra.mxu0 %v360
      %388 = vmatprep.subr.bf16.mxu0 0
      %389 = vmatpush1.bf16.msra.mxu0 %v359
      %390 = vmatprep.subr.bf16.mxu0 0
      %391 = vmatpush1.bf16.msra.mxu0 %v358
      %392 = vmatprep.subr.bf16.mxu0 0
      %393 = vmatpush1.bf16.msra.mxu0 %v357
      %394 = vmatprep.subr.bf16.mxu0 0
      %395 = vmatpush1.bf16.msra.mxu0 %v356
      %396 = vmatprep.subr.bf16.mxu0 0
      %397 = vmatpush1.bf16.msra.mxu0 %v355
      %398 = vmatprep.subr.bf16.mxu0 0
      %399 = vmatpush2.bf16.msra.mxu0 0
      %400 = vmatprep.subr.bf16.mxu0 0
      %401 = vmatpush2.bf16.msra.mxu0 0
      %402 = vmatprep.subr.bf16.mxu0 0
      %403 = vmatpush2.bf16.msra.mxu0 0
      %404 = vmatprep.subr.bf16.mxu0 0
      %405 = vmatpush2.bf16.msra.mxu0 0
      %406 = vmatprep.subr.bf16.mxu0 0
      %407 = vmatpush2.bf16.msra.mxu0 %v366
      %408 = vmatprep.subr.bf16.mxu0 0
      %409 = vmatpush2.bf16.msra.mxu0 %v365
      %410 = vmatprep.subr.bf16.mxu0 0
      %411 = vmatpush2.bf16.msra.mxu0 %v364
      %412 = vmatprep.subr.bf16.mxu0 0
      %413 = vmatpush2.bf16.msra.mxu0 %v363
      %414 = vmatprep.mubr.bf16.mxu0 %v380
      %415 = vmatmul.mubr.bf16.gmra.mxu0 %v274
      %v416 = vpop.f32.mrf.mxu0
      %v417 = vadd.f32 %v305, %v416
      %v418 = vpop.f32.mrf.mxu0
      %v419 = vpop.f32.mrf.mxu0
      %v420 = vpop.f32.mrf.mxu0
      %421 = vdwg.mxu0
      %v422 = vmax.f32 %v417, 0.0
      %v423 = vld [vmem:[%s3] sm:$0x1]
      %v425 = vlaneseq
      %v426 = vshrl.u32 %v425, 7
      %v427 = vsub.s32 0, %v426
      %v428 = vrot.slane %v423, %v427
      %v430 = vmul.f32 %v422, %v428
      %v431 = vld [vmem:[%s4] sm:$0x1]
      %v433 = vlaneseq
      %v434 = vshrl.u32 %v433, 7
      %v435 = vsub.s32 0, %v434
      %v436 = vrot.slane %v431, %v435
      %v438 = vadd.f32 %v430, %v436
      %439 = vst [vmem:[%s244] sm:$0xff] %v438
      %p440 = scmp.lt.s32.totalorder %s20, 1
      %s441 = scalar_select %p440, %s20, 1
      %p442 = scmp.lt.s32.totalorder %s21, 1
      %s443 = scalar_select %p442, %s21, 1
      %s444 = smul.addr %s441, 2
      %s445 = sadd.s32 %s443, %s444
      %s446 = smul.addr %s445, 8
      %s447 = scalar_lea.vmem %s5, %s446
      // Predicated region
      $region45: #{basic_conv2d_g_forward.1} parent=39 // pred_check
        %p448 = pneg %p158
      $region46: #{basic_conv2d_g_forward.1} parent=39 // pred_check_branch
        %450 = sbr.rel (%p448) target = $region48
      $region47: #{basic_conv2d_g_forward.1} parent=39 // pred_region
        _
      $region48: #{basic_conv2d_g_forward.1} parent=39 // pred_fallthru
        _
    $region40: #{basic_conv2d_g_forward.1} parent=5 // pred_fallthru
      _
    %p451 = scmp.le.s32.totalorder 2, %s11
    // Predicated region
    $region49: #{basic_conv2d_g_forward.1} parent=5 // pred_check
      %p452 = pneg %p451
    $region50: #{basic_conv2d_g_forward.1} parent=5 // pred_check_branch
      %454 = sbr.rel (%p452) target = $region52
    $region51: #{basic_conv2d_g_forward.1} parent=5 // pred_region
      %s455 = ssub.s32 %s11, 2
      // Predicated region
      $region53: #{basic_conv2d_g_forward.1} parent=51 // pred_check
        %p456 = pneg %p164
      $region54: #{basic_conv2d_g_forward.1} parent=51 // pred_check_branch
        %458 = sbr.rel (%p456) target = $region56
      $region55: #{basic_conv2d_g_forward.1} parent=51 // pred_region
        %p459 = scmp.lt.s32.totalorder %s22, 1
        %s460 = scalar_select %p459, %s22, 1
        %p461 = scmp.lt.s32.totalorder %s23, 1
        %s462 = scalar_select %p461, %s23, 1
        %s463 = smul.addr %s460, 2
        %s464 = sadd.s32 %s462, %s463
        %s465 = smul.addr %s464, 8
        %s466 = scalar_lea.vmem %s5, %s465
      $region56: #{basic_conv2d_g_forward.1} parent=51 // pred_fallthru
        _
    $region52: #{basic_conv2d_g_forward.1} parent=5 // pred_fallthru
      _
  $region6: #{basic_conv2d_g_forward.1} parent=0 // loop_footer
    %s15 = sadd.s32 1, %s11
  $region7: #{basic_conv2d_g_forward.1} parent=0 // loop_footer_branch
    %10 = sbr.rel target = $region3
  $region8: #{basic_conv2d_g_forward.1} parent=0 // loop_exit
    _

</llo_original>
